<compile_context>
chip_gen: v6e
topology: v6e:2x2x1
jax: 0.10.0
libtpu: 0.0.40
codegen_flags: <defaults>
</compile_context>

<pallas_src>
import functools

import jax
import jax.numpy as jnp
from jax.experimental import pallas as pl
from jax.experimental.pallas import tpu as pltpu

IN_FEATURES = 4
HIDDEN = 128
N_OUT = 2          # real outputs (CartPole actions)
OUT_PAD = 8        # narrow padded output width actually stored to HBM
MXU_N = 128        # fc3 matmul kept 128-wide for the MXU
ALIGN = 16         # batch-tile alignment (covers bf16 (16,128) sublane packing)


def _round_up(n, m):
    return (n + m - 1) // m * m


def qnet_kernel(x_ref, w1_ref, b1_ref, w2_ref, b2_ref, w3_ref, b3_ref, o_ref):
    # ---- fc1: K=4 matmul on the MXU (slack unit); f32 operands, f32 acc ----
    h1 = jnp.dot(x_ref[...], w1_ref[...],
                 preferred_element_type=jnp.float32) + b1_ref[...]
    h1 = jnp.maximum(h1, 0.0)                              # (TB, 128) f32

    # ---- fc2: 128x128 bf16 MXU matmul, f32 accumulation, ReLU in f32 ----
    h2 = jnp.dot(h1.astype(jnp.bfloat16), w2_ref[...],
                 preferred_element_type=jnp.float32) + b2_ref[...]
    h2 = jnp.maximum(h2, 0.0)                              # (TB, 128) f32

    # ---- fc3: 128-wide bf16 MXU matmul; store only the first 8 columns ----
    y = jnp.dot(h2.astype(jnp.bfloat16), w3_ref[...],
                preferred_element_type=jnp.float32)        # (TB, 128) f32
    o_ref[...] = y[:, :OUT_PAD] + b3_ref[...]              # (TB, 8) f32 store


def pack_kernel_params(params):
    """Cast / pad the f32 reference params into the dtypes the kernel expects."""
    w1, b1, w2, b2, w3, b3 = params
    w3p = jnp.zeros((HIDDEN, MXU_N), jnp.float32).at[:, :w3.shape[1]].set(w3)
    b3p = jnp.zeros((1, OUT_PAD), jnp.float32).at[:, :b3.shape[1]].set(b3)
    return (
        w1.astype(jnp.float32),      # fc1 stays f32 (MXU slack; tighter accuracy)
        b1.astype(jnp.float32),
        w2.astype(jnp.bfloat16),     # big MXU operands in bf16
        b2.astype(jnp.float32),
        w3p.astype(jnp.bfloat16),
        b3p.astype(jnp.float32),
    )


@functools.partial(jax.jit, static_argnames=("block_b",))
def qnet_forward(x, kparams, *, block_b=4096):
    w1, b1, w2, b2, w3p, b3p = kparams
    B, F = x.shape

    # Batch tile: multiple of ALIGN, capped at block_b, and chosen so the grid
    # has >= 2 steps when possible (v7x megacore sharding of the batch axis).
    half = _round_up(pl.cdiv(B, 2), ALIGN)
    TB = max(ALIGN, min(block_b, half))
    padded_B = _round_up(B, TB)

    xp = x if padded_B == B else jnp.pad(x, ((0, padded_B - B), (0, 0)))

    const = lambda i: (0, 0)                      # weights resident across steps
    out = pl.pallas_call(
        qnet_kernel,
        out_shape=jax.ShapeDtypeStruct((padded_B, OUT_PAD), jnp.float32),
        grid=(padded_B // TB,),
        in_specs=[
            pl.BlockSpec((TB, F), lambda i: (i, 0)),
            pl.BlockSpec((F, HIDDEN), const),
            pl.BlockSpec((1, HIDDEN), const),
            pl.BlockSpec((HIDDEN, HIDDEN), const),
            pl.BlockSpec((1, HIDDEN), const),
            pl.BlockSpec((HIDDEN, MXU_N), const),
            pl.BlockSpec((1, OUT_PAD), const),
        ],
        out_specs=pl.BlockSpec((TB, OUT_PAD), lambda i: (i, 0)),
        compiler_params=pltpu.CompilerParams(
            dimension_semantics=("parallel",),    # shard batch across TCs (v7x)
            vmem_limit_bytes=48 * 1024 * 1024,    # intermediates ~3 KB/row bound TB
        ),
    )(xp, w1, b1, w2, b2, w3p, b3p)
    # Narrow (32 B/row) output -> this slice is nearly free now.
    return out[:B, :N_OUT]


def init_params(key):
    # Deterministic init mimicking nn.Linear default U[-1/sqrt(fan_in), +1/sqrt(fan_in)].
    def linear(key, fan_in, fan_out):
        kw, kb = jax.random.split(key)
        bound = 1.0 / jnp.sqrt(fan_in)
        w = jax.random.uniform(kw, (fan_in, fan_out), jnp.float32, -bound, bound)
        b = jax.random.uniform(kb, (1, fan_out), jnp.float32, -bound, bound)
        return w, b

    k1, k2, k3 = jax.random.split(key, 3)
    w1, b1 = linear(k1, IN_FEATURES, HIDDEN)
    w2, b2 = linear(k2, HIDDEN, HIDDEN)
    w3, b3 = linear(k3, HIDDEN, N_OUT)
    return (w1, b1, w2, b2, w3, b3)


def qnet_reference(x, params):
    # Original (pure f32) nn.Module semantics.
    w1, b1, w2, b2, w3, b3 = params
    h1 = jnp.maximum(x @ w1 + b1, 0.0)
    h2 = jnp.maximum(h1 @ w2 + b2, 0.0)
    return h2 @ w3 + b3


# TODO(synk): sample_action's epsilon-greedy branch (random.random(), argmax.item())
# is host-side control flow and is intentionally not implemented as a kernel.

if __name__ == "__main__":
    key = jax.random.PRNGKey(0)
    kp, kx = jax.random.split(key)
    params = init_params(kp)
    kparams = pack_kernel_params(params)

    B = 8  # small batch of CartPole-style observations (4 features each)
    x = jax.random.normal(kx, (B, 4), jnp.float32)

    out = qnet_forward(x, kparams)
    out = jax.block_until_ready(out)

    ref = qnet_reference(x, params)
    assert out.shape == (B, N_OUT), out.shape
    # bf16 MXU operands for fc2/fc3 -> relaxed tolerance vs the f32 reference.
    assert jnp.allclose(out, ref, atol=5e-2, rtol=5e-2), (
        "mismatch vs reference: max |diff| = %g"
        % float(jnp.max(jnp.abs(out - ref)))
    )

    print("KERNEL_OK")
</pallas_src>

<mosaic_0001>
module attributes {stable_mosaic.version = 11 : i64} {
  func.func @qnet_kernel(%arg0: i32, %arg1: memref<16x4xf32, #tpu.memory_space<vmem>>, %arg2: memref<4x128xf32, #tpu.memory_space<vmem>>, %arg3: memref<1x128xf32, #tpu.memory_space<vmem>>, %arg4: memref<128x128xbf16, #tpu.memory_space<vmem>>, %arg5: memref<1x128xf32, #tpu.memory_space<vmem>>, %arg6: memref<128x128xbf16, #tpu.memory_space<vmem>>, %arg7: memref<1x8xf32, #tpu.memory_space<vmem>>, %arg8: memref<16x8xf32, #tpu.memory_space<vmem>>) attributes {dimension_semantics = [#tpu.dimension_semantics<parallel>], iteration_bounds = array<i64: 1>, scalar_prefetch = 0 : i64, scratch_operands = 0 : i64, tpu.core_type = #tpu.core_type<tc>, window_params = [{transform_indices = @transform_0, window_bounds = array<i64: 16, 4>}, {pipeline_mode = #tpu.pipeline_mode<synchronous>, transform_indices = @transform_1, window_bounds = array<i64: 4, 128>}, {pipeline_mode = #tpu.pipeline_mode<synchronous>, transform_indices = @transform_2, window_bounds = array<i64: 1, 128>}, {pipeline_mode = #tpu.pipeline_mode<synchronous>, transform_indices = @transform_3, window_bounds = array<i64: 128, 128>}, {pipeline_mode = #tpu.pipeline_mode<synchronous>, transform_indices = @transform_4, window_bounds = array<i64: 1, 128>}, {pipeline_mode = #tpu.pipeline_mode<synchronous>, transform_indices = @transform_5, window_bounds = array<i64: 128, 128>}, {pipeline_mode = #tpu.pipeline_mode<synchronous>, transform_indices = @transform_6, window_bounds = array<i64: 1, 8>}, {transform_indices = @transform_7, window_bounds = array<i64: 16, 8>}]} {
    %c0 = arith.constant 0 : index
    %c0_0 = arith.constant 0 : index
    %0 = vector.load %arg1[%c0, %c0_0] : memref<16x4xf32, #tpu.memory_space<vmem>>, vector<16x4xf32>
    %c0_1 = arith.constant 0 : index
    %c0_2 = arith.constant 0 : index
    %1 = vector.load %arg2[%c0_1, %c0_2] : memref<4x128xf32, #tpu.memory_space<vmem>>, vector<4x128xf32>
    %cst = arith.constant dense<0.000000e+00> : vector<16x128xf32>
    %2 = tpu.matmul %0, %1, %cst {dimension_numbers = #tpu.dot_dimension_numbers<[1], [0], [0], [1], [0, 0, 1, 1], [], []>} : vector<16x4xf32>, vector<4x128xf32>, vector<16x128xf32> -> vector<16x128xf32>
    %c0_3 = arith.constant 0 : index
    %c0_4 = arith.constant 0 : index
    %3 = vector.load %arg3[%c0_3, %c0_4] : memref<1x128xf32, #tpu.memory_space<vmem>>, vector<1x128xf32>
    %4 = vector.broadcast %3 : vector<1x128xf32> to vector<16x128xf32>
    %5 = arith.addf %2, %4 : vector<16x128xf32>
    %cst_5 = arith.constant 0.000000e+00 : f32
    %6 = vector.broadcast %cst_5 : f32 to vector<16x128xf32>
    %7 = arith.maximumf %5, %6 : vector<16x128xf32>
    %8 = arith.truncf %7 : vector<16x128xf32> to vector<16x128xbf16>
    %c0_6 = arith.constant 0 : index
    %c0_7 = arith.constant 0 : index
    %9 = vector.load %arg4[%c0_6, %c0_7] : memref<128x128xbf16, #tpu.memory_space<vmem>>, vector<128x128xbf16>
    %cst_8 = arith.constant dense<0.000000e+00> : vector<16x128xf32>
    %10 = tpu.matmul %8, %9, %cst_8 {dimension_numbers = #tpu.dot_dimension_numbers<[1], [0], [0], [1], [0, 0, 1, 1], [], []>} : vector<16x128xbf16>, vector<128x128xbf16>, vector<16x128xf32> -> vector<16x128xf32>
    %c0_9 = arith.constant 0 : index
    %c0_10 = arith.constant 0 : index
    %11 = vector.load %arg5[%c0_9, %c0_10] : memref<1x128xf32, #tpu.memory_space<vmem>>, vector<1x128xf32>
    %12 = vector.broadcast %11 : vector<1x128xf32> to vector<16x128xf32>
    %13 = arith.addf %10, %12 : vector<16x128xf32>
    %cst_11 = arith.constant 0.000000e+00 : f32
    %14 = vector.broadcast %cst_11 : f32 to vector<16x128xf32>
    %15 = arith.maximumf %13, %14 : vector<16x128xf32>
    %16 = arith.truncf %15 : vector<16x128xf32> to vector<16x128xbf16>
    %c0_12 = arith.constant 0 : index
    %c0_13 = arith.constant 0 : index
    %17 = vector.load %arg6[%c0_12, %c0_13] : memref<128x128xbf16, #tpu.memory_space<vmem>>, vector<128x128xbf16>
    %cst_14 = arith.constant dense<0.000000e+00> : vector<16x128xf32>
    %18 = tpu.matmul %16, %17, %cst_14 {dimension_numbers = #tpu.dot_dimension_numbers<[1], [0], [0], [1], [0, 0, 1, 1], [], []>} : vector<16x128xbf16>, vector<128x128xbf16>, vector<16x128xf32> -> vector<16x128xf32>
    %19 = vector.extract_strided_slice %18 {offsets = [0, 0], sizes = [16, 8], strides = [1, 1]} : vector<16x128xf32> to vector<16x8xf32>
    %c0_15 = arith.constant 0 : index
    %c0_16 = arith.constant 0 : index
    %20 = vector.load %arg7[%c0_15, %c0_16] : memref<1x8xf32, #tpu.memory_space<vmem>>, vector<1x8xf32>
    %21 = vector.broadcast %20 : vector<1x8xf32> to vector<16x8xf32>
    %22 = arith.addf %19, %21 : vector<16x8xf32>
    %c0_17 = arith.constant 0 : index
    %c0_18 = arith.constant 0 : index
    %23 = vector.load %arg8[%c0_17, %c0_18] : memref<16x8xf32, #tpu.memory_space<vmem>>, vector<16x8xf32>
    tpu.vector_store %arg8[%c0_17, %c0_18], %22 {strides = array<i32>} : memref<16x8xf32, #tpu.memory_space<vmem>>, vector<16x8xf32>,
    return
  }
  func.func @transform_0(%arg0: i32) -> (i32, i32) {
    %c0_i32 = arith.constant 0 : i32
    %c0_i32_0 = arith.constant 0 : i32
    return %arg0, %c0_i32 : i32, i32
  }
  func.func @transform_1(%arg0: i32) -> (i32, i32) {
    %c0_i32 = arith.constant 0 : i32
    %c0_i32_0 = arith.constant 0 : i32
    %c0_i32_1 = arith.constant 0 : i32
    return %c0_i32, %c0_i32_0 : i32, i32
  }
  func.func @transform_2(%arg0: i32) -> (i32, i32) {
    %c0_i32 = arith.constant 0 : i32
    %c0_i32_0 = arith.constant 0 : i32
    %c0_i32_1 = arith.constant 0 : i32
    return %c0_i32, %c0_i32_0 : i32, i32
  }
  func.func @transform_3(%arg0: i32) -> (i32, i32) {
    %c0_i32 = arith.constant 0 : i32
    %c0_i32_0 = arith.constant 0 : i32
    %c0_i32_1 = arith.constant 0 : i32
    return %c0_i32, %c0_i32_0 : i32, i32
  }
  func.func @transform_4(%arg0: i32) -> (i32, i32) {
    %c0_i32 = arith.constant 0 : i32
    %c0_i32_0 = arith.constant 0 : i32
    %c0_i32_1 = arith.constant 0 : i32
    return %c0_i32, %c0_i32_0 : i32, i32
  }
  func.func @transform_5(%arg0: i32) -> (i32, i32) {
    %c0_i32 = arith.constant 0 : i32
    %c0_i32_0 = arith.constant 0 : i32
    %c0_i32_1 = arith.constant 0 : i32
    return %c0_i32, %c0_i32_0 : i32, i32
  }
  func.func @transform_6(%arg0: i32) -> (i32, i32) {
    %c0_i32 = arith.constant 0 : i32
    %c0_i32_0 = arith.constant 0 : i32
    %c0_i32_1 = arith.constant 0 : i32
    return %c0_i32, %c0_i32_0 : i32, i32
  }
  func.func @transform_7(%arg0: i32) -> (i32, i32) {
    %c0_i32 = arith.constant 0 : i32
    %c0_i32_0 = arith.constant 0 : i32
    return %arg0, %c0_i32 : i32, i32
  }
}

</mosaic_0001>

<llo_original>
// kernel: qnet_forward.1
$region0: #{qnet_forward.1}
  #allocation0 [shape = 'u32[]', space=smem, size = 0x4, offset = 0x4, fixed_abs, tag = 'smem constant byte address 0x4 - core index']
  #allocation1 [shape = 'u32[144,128]{1,0:T(1,128)}', space=vmem, size = 0x12000, scoped, tag = 'internal scratch']
  %s0 = inlined_call_operand.vmem [shape: f32[16,4], index: 0, kind: input, shape index: {}]
  %s1 = inlined_call_operand.vmem [shape: f32[4,128], index: 1, kind: input, shape index: {}]
  %s2 = inlined_call_operand.vmem [shape: f32[1,128], index: 2, kind: input, shape index: {}]
  %s3 = inlined_call_operand.hbm [shape: bf16[128,128], index: 3, kind: input, shape index: {}]
  %s4 = inlined_call_operand.vmem [shape: f32[1,128], index: 4, kind: input, shape index: {}]
  %s5 = inlined_call_operand.hbm [shape: bf16[128,128], index: 5, kind: input, shape index: {}]
  %s6 = inlined_call_operand.vmem [shape: f32[1,8], index: 6, kind: input, shape index: {}]
  %s7 = inlined_call_operand.vmem [shape: f32[16,8], index: 7, kind: output, shape index: {}]
  %s8 = sld [smem:[#allocation0]]
  $region46: #{qnet_forward.1} parent=0
    _
  %s10 = ssub.s32 1, %s8
  %s11 = scalar_select 0, %s10, %s8
  $region1: #{qnet_forward.1} parent=0
    #allocation2 [shape = 'u8[32768]{0}', space=vmem, size = 0x8000, scoped, tag = 'input window, operand 3, single buffered']
    #allocation3 [shape = 's32[1]{0}', space=sflag, size = 0x4, scoped, tag = 'scoped memory for qnet_forward.1']
    #allocation4 [shape = 'u8[32768]{0}', space=vmem, size = 0x8000, scoped, tag = 'input window, operand 5, single buffered']
    #allocation5 [shape = 's32[1]{0}', space=sflag, size = 0x4, scoped, tag = 'scoped memory for qnet_forward.1']
    %12 = vsyncpa [#allocation3], 0
    %13 = vsyncpa [#allocation5], 0
    // Predicated region
    $region2: #{qnet_forward.1} parent=1 // pred_check
      _
    $region3: #{qnet_forward.1} parent=1 // pred_check_branch
      %15 = sbr.rel (0) target = $region5
    $region4: #{qnet_forward.1} parent=1 // pred_region
      _
    $region5: #{qnet_forward.1} parent=1 // pred_fallthru
      _
    // Predicated region
    $region6: #{qnet_forward.1} parent=1 // pred_check
      _
    $region7: #{qnet_forward.1} parent=1 // pred_check_branch
      %17 = sbr.rel (0) target = $region9
    $region8: #{qnet_forward.1} parent=1 // pred_region
      _
    $region9: #{qnet_forward.1} parent=1 // pred_fallthru
      _
    // Predicated region
    $region10: #{qnet_forward.1} parent=1 // pred_check
      _
    $region11: #{qnet_forward.1} parent=1 // pred_check_branch
      %19 = sbr.rel (0) target = $region13
    $region12: #{qnet_forward.1} parent=1 // pred_region
      _
    $region13: #{qnet_forward.1} parent=1 // pred_fallthru
      _
    // Predicated region
    $region14: #{qnet_forward.1} parent=1 // pred_check
      _
    $region15: #{qnet_forward.1} parent=1 // pred_check_branch
      %21 = sbr.rel (0) target = $region17
    $region16: #{qnet_forward.1} parent=1 // pred_region
      %s23 = ssub.s32 1024, 1024
      %24 = vsyncadd [#allocation3], %s23
      %s25 = sshll.u32 [#allocation2], 4
      %s26 = int_to_ptr.vmem [resolvable:$true] %s25
      %31 = dma.hbm_to_vmem [thread:$0]  %s3, 1024, %s26, [#allocation3], 64, 64, 4
    $region17: #{qnet_forward.1} parent=1 // pred_fallthru
      _
    // Predicated region
    $region18: #{qnet_forward.1} parent=1 // pred_check
      _
    $region19: #{qnet_forward.1} parent=1 // pred_check_branch
      %33 = sbr.rel (0) target = $region21
    $region20: #{qnet_forward.1} parent=1 // pred_region
      _
    $region21: #{qnet_forward.1} parent=1 // pred_fallthru
      _
    // Predicated region
    $region22: #{qnet_forward.1} parent=1 // pred_check
      _
    $region23: #{qnet_forward.1} parent=1 // pred_check_branch
      %35 = sbr.rel (0) target = $region25
    $region24: #{qnet_forward.1} parent=1 // pred_region
      %s37 = ssub.s32 1024, 1024
      %38 = vsyncadd [#allocation5], %s37
      %s39 = sshll.u32 [#allocation4], 4
      %s40 = int_to_ptr.vmem [resolvable:$true] %s39
      %45 = dma.hbm_to_vmem [thread:$0]  %s5, 1024, %s40, [#allocation5], 64, 64, 4
    $region25: #{qnet_forward.1} parent=1 // pred_fallthru
      _
    // Predicated region
    $region26: #{qnet_forward.1} parent=1 // pred_check
      _
    $region27: #{qnet_forward.1} parent=1 // pred_check_branch
      %47 = sbr.rel (0) target = $region29
    $region28: #{qnet_forward.1} parent=1 // pred_region
      _
    $region29: #{qnet_forward.1} parent=1 // pred_fallthru
      _
    // Predicated region
    $region30: #{qnet_forward.1} parent=1 // pred_check
      _
    $region31: #{qnet_forward.1} parent=1 // pred_check_branch
      %49 = sbr.rel (0) target = $region33
    $region32: #{qnet_forward.1} parent=1 // pred_region
      %50 = dma.done [#allocation3], 1024
    $region33: #{qnet_forward.1} parent=1 // pred_fallthru
      _
    // Predicated region
    $region34: #{qnet_forward.1} parent=1 // pred_check
      _
    $region35: #{qnet_forward.1} parent=1 // pred_check_branch
      %52 = sbr.rel (0) target = $region37
    $region36: #{qnet_forward.1} parent=1 // pred_region
      %53 = dma.done [#allocation5], 1024
    $region37: #{qnet_forward.1} parent=1 // pred_fallthru
      _
    %v55 = vld [vmem:[%s0] sm:$0xff]
    %v56 = vld [vmem:[%s0 + $0x8] sm:$0xff]
    %v57 = vld [vmem:[%s1] sm:$0xf]
    %v58 = vld [vmem:[%s2] sm:$0x1]
    %v60 = vlaneseq
    %v61 = vshrl.u32 %v60, 7
    %v62 = vsub.s32 0, %v61
    %v63 = vrot.slane %v58, %v62
    %vm65 = vcmask 31744
    %v67 = vsel %vm65, %v55, 0
    %v70 = vsel %vm65, %v56, 0
    %vm72 = vcmask 1043456
    %v74 = vsel %vm72, %v57, 0
    %76 = vmatprep.subr.mxu0 0.0
    %77 = vmatpush1.msra.mxu0 0.0
    %78 = vmatprep.subr.mxu0 0.0
    %79 = vmatpush1.msra.mxu0 0.0
    %80 = vmatprep.subr.mxu0 0.0
    %81 = vmatpush1.msra.mxu0 0.0
    %82 = vmatprep.subr.mxu0 0.0
    %83 = vmatpush1.msra.mxu0 0.0
    %84 = vmatprep.subr.mxu0 0.0
    %85 = vmatpush1.msra.mxu0 0.0
    %86 = vmatprep.subr.mxu0 0.0
    %87 = vmatpush1.msra.mxu0 0.0
    %88 = vmatprep.subr.mxu0 0.0
    %89 = vmatpush1.msra.mxu0 0.0
    %90 = vmatprep.subr.mxu0 0.0
    %91 = vmatpush1.msra.mxu0 0.0
    %92 = vmatprep.subr.mxu0 0.0
    %93 = vmatpush1.msra.mxu0 0.0
    %94 = vmatprep.subr.mxu0 0.0
    %95 = vmatpush1.msra.mxu0 0.0
    %96 = vmatprep.subr.mxu0 0.0
    %97 = vmatpush1.msra.mxu0 0.0
    %98 = vmatprep.subr.mxu0 0.0
    %99 = vmatpush1.msra.mxu0 0.0
    %100 = vmatprep.subr.mxu0 0.0
    %101 = vmatpush1.msra.mxu0 0.0
    %102 = vmatprep.subr.mxu0 0.0
    %103 = vmatpush1.msra.mxu0 0.0
    %104 = vmatprep.subr.mxu0 0.0
    %105 = vmatpush1.msra.mxu0 0.0
    %106 = vmatprep.subr.mxu0 0.0
    %107 = vmatpush1.msra.mxu0 %v74
    %108 = vmatprep.subr.mxu0 0.0
    %109 = vmatpush2.msra.mxu0 0.0
    %110 = vmatprep.subr.mxu0 0.0
    %111 = vmatpush2.msra.mxu0 0.0
    %112 = vmatprep.subr.mxu0 0.0
    %113 = vmatpush2.msra.mxu0 0.0
    %114 = vmatprep.subr.mxu0 0.0
    %115 = vmatpush2.msra.mxu0 0.0
    %116 = vmatprep.subr.mxu0 0.0
    %117 = vmatpush2.msra.mxu0 0.0
    %118 = vmatprep.subr.mxu0 0.0
    %119 = vmatpush2.msra.mxu0 0.0
    %120 = vmatprep.subr.mxu0 0.0
    %121 = vmatpush2.msra.mxu0 0.0
    %122 = vmatprep.subr.mxu0 0.0
    %123 = vmatpush2.msra.mxu0 0.0
    %124 = vmatprep.subr.mxu0 0.0
    %125 = vmatpush2.msra.mxu0 0.0
    %126 = vmatprep.subr.mxu0 0.0
    %127 = vmatpush2.msra.mxu0 0.0
    %128 = vmatprep.subr.mxu0 0.0
    %129 = vmatpush2.msra.mxu0 0.0
    %130 = vmatprep.subr.mxu0 0.0
    %131 = vmatpush2.msra.mxu0 0.0
    %132 = vmatprep.subr.mxu0 0.0
    %133 = vmatpush2.msra.mxu0 0.0
    %134 = vmatprep.subr.mxu0 0.0
    %135 = vmatpush2.msra.mxu0 0.0
    %136 = vmatprep.subr.mxu0 0.0
    %137 = vmatpush2.msra.mxu0 0.0
    %138 = vmatprep.subr.mxu0 0.0
    %139 = vmatpush2.msra.mxu0 0.0
    %140 = vmatprep.mubr.f32.mxu0 0.0
    %141 = vmatmul.mubr.f32.gmra.mxu0 %v67
    %v142 = vpop.f32.mrf.mxu0
    %v143 = vadd.f32 %v63, %v142
    %v144 = vpop.f32.mrf.mxu0
    %145 = vmatprep.mubr.f32.mxu0 0.0
    %146 = vmatmul.mubr.f32.gmra.mxu0 %v70
    %v147 = vpop.f32.mrf.mxu0
    %v148 = vadd.f32 %v63, %v147
    %v149 = vpop.f32.mrf.mxu0
    %150 = vdwg.mxu0
    %v151 = vmax.f32 %v143, 0.0
    %v152 = vmax.f32 %v148, 0.0
    %v153 = vpack.c.bf16 %v152, %v151
    %v154 = vld [vmem:[#allocation2] sm:$0xf]
    %v155 = vld [vmem:[#allocation2 + $0x4] sm:$0xf]
    %v156 = vld [vmem:[#allocation2 + $0x8] sm:$0xf]
    %v157 = vld [vmem:[#allocation2 + $0xc] sm:$0xf]
    %v158 = vld [vmem:[#allocation2 + $0x10] sm:$0xf]
    %v159 = vld [vmem:[#allocation2 + $0x14] sm:$0xf]
    %v160 = vld [vmem:[#allocation2 + $0x18] sm:$0xf]
    %v161 = vld [vmem:[#allocation2 + $0x1c] sm:$0xf]
    %v162 = vld [vmem:[#allocation2 + $0x20] sm:$0xf]
    %v163 = vld [vmem:[#allocation2 + $0x24] sm:$0xf]
    %v164 = vld [vmem:[#allocation2 + $0x28] sm:$0xf]
    %v165 = vld [vmem:[#allocation2 + $0x2c] sm:$0xf]
    %v166 = vld [vmem:[#allocation2 + $0x30] sm:$0xf]
    %v167 = vld [vmem:[#allocation2 + $0x34] sm:$0xf]
    %v168 = vld [vmem:[#allocation2 + $0x38] sm:$0xf]
    %v169 = vld [vmem:[#allocation2 + $0x3c] sm:$0xf]
    %v170 = vld [vmem:[%s4] sm:$0x1]
    %v172 = vlaneseq
    %v173 = vshrl.u32 %v172, 7
    %v174 = vsub.s32 0, %v173
    %v175 = vrot.slane %v170, %v174
    %v193 = vunpack.c.l.b16 %v154
    %v194 = vunpack.c.l.b16 %v155
    %v195 = vunpack.c.l.b16 %v156
    %v196 = vunpack.c.l.b16 %v157
    %v197 = vunpack.c.l.b16 %v158
    %v198 = vunpack.c.l.b16 %v159
    %v199 = vunpack.c.l.b16 %v160
    %v200 = vunpack.c.l.b16 %v161
    %v201 = vunpack.c.l.b16 %v162
    %v202 = vunpack.c.l.b16 %v163
    %v203 = vunpack.c.l.b16 %v164
    %v204 = vunpack.c.l.b16 %v165
    %v205 = vunpack.c.l.b16 %v166
    %v206 = vunpack.c.l.b16 %v167
    %v207 = vunpack.c.l.b16 %v168
    %v208 = vunpack.c.l.b16 %v169
    %v209 = vpack.c.b16 %v194, %v193
    %v210 = vpack.c.b16 %v196, %v195
    %v211 = vpack.c.b16 %v198, %v197
    %v212 = vpack.c.b16 %v200, %v199
    %v213 = vpack.c.b16 %v202, %v201
    %v214 = vpack.c.b16 %v204, %v203
    %v215 = vpack.c.b16 %v206, %v205
    %v216 = vpack.c.b16 %v208, %v207
    %225 = vmatprep.subr.bf16.mxu0 0
    %226 = vmatpush1.bf16.msra.mxu0 %v216
    %227 = vmatprep.subr.bf16.mxu0 0
    %228 = vmatpush1.bf16.msra.mxu0 %v215
    %229 = vmatprep.subr.bf16.mxu0 0
    %230 = vmatpush1.bf16.msra.mxu0 %v214
    %231 = vmatprep.subr.bf16.mxu0 0
    %232 = vmatpush1.bf16.msra.mxu0 %v213
    %233 = vmatprep.subr.bf16.mxu0 0
    %234 = vmatpush1.bf16.msra.mxu0 %v212
    %235 = vmatprep.subr.bf16.mxu0 0
    %236 = vmatpush1.bf16.msra.mxu0 %v211
    %237 = vmatprep.subr.bf16.mxu0 0
    %238 = vmatpush1.bf16.msra.mxu0 %v210
    %239 = vmatprep.subr.bf16.mxu0 0
    %240 = vmatpush1.bf16.msra.mxu0 %v209
    %241 = vmatprep.subr.bf16.mxu0 0
    %242 = vmatpush2.bf16.msra.mxu0 0
    %243 = vmatprep.subr.bf16.mxu0 0
    %244 = vmatpush2.bf16.msra.mxu0 0
    %245 = vmatprep.subr.bf16.mxu0 0
    %246 = vmatpush2.bf16.msra.mxu0 0
    %247 = vmatprep.subr.bf16.mxu0 0
    %248 = vmatpush2.bf16.msra.mxu0 0
    %249 = vmatprep.subr.bf16.mxu0 0
    %250 = vmatpush2.bf16.msra.mxu0 0
    %251 = vmatprep.subr.bf16.mxu0 0
    %252 = vmatpush2.bf16.msra.mxu0 0
    %253 = vmatprep.subr.bf16.mxu0 0
    %254 = vmatpush2.bf16.msra.mxu0 0
    %255 = vmatprep.subr.bf16.mxu0 0
    %256 = vmatpush2.bf16.msra.mxu0 0
    %257 = vmatprep.mubr.bf16.mxu0 0
    %258 = vmatmul.mubr.bf16.gmra.mxu0 %v153
    %v259 = vpop.f32.mrf.mxu0
    %v260 = vadd.f32 %v175, %v259
    %v261 = vpop.f32.mrf.mxu0
    %v262 = vpop.f32.mrf.mxu0
    %v263 = vadd.f32 %v175, %v262
    %v264 = vpop.f32.mrf.mxu0
    %265 = vdwg.mxu0
    %v266 = vmax.f32 %v260, 0.0
    %v267 = vmax.f32 %v263, 0.0
    %v268 = vpack.c.bf16 %v267, %v266
    %v269 = vld [vmem:[#allocation4] sm:$0xf]
    %v270 = vld [vmem:[#allocation4 + $0x4] sm:$0xf]
    %v271 = vld [vmem:[#allocation4 + $0x8] sm:$0xf]
    %v272 = vld [vmem:[#allocation4 + $0xc] sm:$0xf]
    %v273 = vld [vmem:[#allocation4 + $0x10] sm:$0xf]
    %v274 = vld [vmem:[#allocation4 + $0x14] sm:$0xf]
    %v275 = vld [vmem:[#allocation4 + $0x18] sm:$0xf]
    %v276 = vld [vmem:[#allocation4 + $0x1c] sm:$0xf]
    %v277 = vld [vmem:[#allocation4 + $0x20] sm:$0xf]
    %v278 = vld [vmem:[#allocation4 + $0x24] sm:$0xf]
    %v279 = vld [vmem:[#allocation4 + $0x28] sm:$0xf]
    %v280 = vld [vmem:[#allocation4 + $0x2c] sm:$0xf]
    %v281 = vld [vmem:[#allocation4 + $0x30] sm:$0xf]
    %v282 = vld [vmem:[#allocation4 + $0x34] sm:$0xf]
    %v283 = vld [vmem:[#allocation4 + $0x38] sm:$0xf]
    %v284 = vld [vmem:[#allocation4 + $0x3c] sm:$0xf]
    %v301 = vunpack.c.l.b16 %v269
    %v302 = vunpack.c.l.b16 %v270
    %v303 = vunpack.c.l.b16 %v271
    %v304 = vunpack.c.l.b16 %v272
    %v305 = vunpack.c.l.b16 %v273
    %v306 = vunpack.c.l.b16 %v274
    %v307 = vunpack.c.l.b16 %v275
    %v308 = vunpack.c.l.b16 %v276
    %v309 = vunpack.c.l.b16 %v277
    %v310 = vunpack.c.l.b16 %v278
    %v311 = vunpack.c.l.b16 %v279
    %v312 = vunpack.c.l.b16 %v280
    %v313 = vunpack.c.l.b16 %v281
    %v314 = vunpack.c.l.b16 %v282
    %v315 = vunpack.c.l.b16 %v283
    %v316 = vunpack.c.l.b16 %v284
    %v317 = vpack.c.b16 %v302, %v301
    %v318 = vpack.c.b16 %v304, %v303
    %v319 = vpack.c.b16 %v306, %v305
    %v320 = vpack.c.b16 %v308, %v307
    %v321 = vpack.c.b16 %v310, %v309
    %v322 = vpack.c.b16 %v312, %v311
    %v323 = vpack.c.b16 %v314, %v313
    %v324 = vpack.c.b16 %v316, %v315
    %333 = vmatprep.subr.bf16.mxu0 0
    %334 = vmatpush1.bf16.msra.mxu0 %v324
    %335 = vmatprep.subr.bf16.mxu0 0
    %336 = vmatpush1.bf16.msra.mxu0 %v323
    %337 = vmatprep.subr.bf16.mxu0 0
    %338 = vmatpush1.bf16.msra.mxu0 %v322
    %339 = vmatprep.subr.bf16.mxu0 0
    %340 = vmatpush1.bf16.msra.mxu0 %v321
    %341 = vmatprep.subr.bf16.mxu0 0
    %342 = vmatpush1.bf16.msra.mxu0 %v320
    %343 = vmatprep.subr.bf16.mxu0 0
    %344 = vmatpush1.bf16.msra.mxu0 %v319
    %345 = vmatprep.subr.bf16.mxu0 0
    %346 = vmatpush1.bf16.msra.mxu0 %v318
    %347 = vmatprep.subr.bf16.mxu0 0
    %348 = vmatpush1.bf16.msra.mxu0 %v317
    %349 = vmatprep.subr.bf16.mxu0 0
    %350 = vmatpush2.bf16.msra.mxu0 0
    %351 = vmatprep.subr.bf16.mxu0 0
    %352 = vmatpush2.bf16.msra.mxu0 0
    %353 = vmatprep.subr.bf16.mxu0 0
    %354 = vmatpush2.bf16.msra.mxu0 0
    %355 = vmatprep.subr.bf16.mxu0 0
    %356 = vmatpush2.bf16.msra.mxu0 0
    %357 = vmatprep.subr.bf16.mxu0 0
    %358 = vmatpush2.bf16.msra.mxu0 0
    %359 = vmatprep.subr.bf16.mxu0 0
    %360 = vmatpush2.bf16.msra.mxu0 0
    %361 = vmatprep.subr.bf16.mxu0 0
    %362 = vmatpush2.bf16.msra.mxu0 0
    %363 = vmatprep.subr.bf16.mxu0 0
    %364 = vmatpush2.bf16.msra.mxu0 0
    %365 = vmatprep.mubr.bf16.mxu0 0
    %366 = vmatmul.mubr.bf16.gmra.mxu0 %v268
    %v367 = vpop.f32.mrf.mxu0
    %v368 = vadd.f32 0.0, %v367
    %v369 = vpop.f32.mrf.mxu0
    %v370 = vpop.f32.mrf.mxu0
    %v371 = vadd.f32 0.0, %v370
    %v372 = vpop.f32.mrf.mxu0
    %373 = vdwg.mxu0
    %v374 = vld [vmem:[%s6] sm:$0x1]
    %v376 = vlaneseq
    %v377 = vshrl.u32 %v376, 7
    %v378 = vsub.s32 0, %v377
    %v379 = vrot.slane %v374, %v378
    %v381 = vadd.f32 %v368, %v379
    %v382 = vadd.f32 %v371, %v379
    %vm383 = vcmask 64512
    %384 = vst.msk [vmem:[%s7] sm:$0xff] %vm383, %v381
    %385 = vst.msk [vmem:[%s7 + $0x8] sm:$0xff] %vm383, %v382
    // Predicated region
    $region38: #{qnet_forward.1} parent=1 // pred_check
      _
    $region39: #{qnet_forward.1} parent=1 // pred_check_branch
      %387 = sbr.rel (0) target = $region41
    $region40: #{qnet_forward.1} parent=1 // pred_region
      _
    $region41: #{qnet_forward.1} parent=1 // pred_fallthru
      _
    // Predicated region
    $region42: #{qnet_forward.1} parent=1 // pred_check
      _
    $region43: #{qnet_forward.1} parent=1 // pred_check_branch
      %389 = sbr.rel (0) target = $region45
    $region44: #{qnet_forward.1} parent=1 // pred_region
      _
    $region45: #{qnet_forward.1} parent=1 // pred_fallthru
      _
    %390 = vsyncpa [#allocation3], 1
    %391 = vsyncpa [#allocation5], 1

</llo_original>
